<compile_context>
chip_gen: v5e
topology: v5e:2x2
jax: 0.10.0
libtpu: 0.0.40
codegen_flags: <defaults>
</compile_context>

<pallas_src>
import functools

import jax
import jax.numpy as jnp
from jax import lax
from jax.experimental import pallas as pl
from jax.experimental.pallas import tpu as pltpu

RMS_EPS = 1e-6


def _round_up(x, m):
    return ((x + m - 1) // m) * m


# --------------------------------- kernels --------------------------------- #

def _rmsnorm_kernel(x_ref, nw_ref, xn_ref):
    """RMSNorm one row tile.  x_ref: (TR, H); nw_ref: (1, H); xn_ref: (TR, H)."""
    x = x_ref[...].astype(jnp.float32)
    var = jnp.mean(x * x, axis=-1, keepdims=True)
    xn = x * lax.rsqrt(var + RMS_EPS) * nw_ref[...].astype(jnp.float32)
    xn_ref[...] = xn.astype(xn_ref.dtype)


def _proj_kernel(xn_ref, w_ref, o_ref):
    """logits tile = xn @ W^T.

    xn_ref: (TR, H)  normalized rows, already in the MXU input dtype.
    w_ref : (TV, H)  lm_head weight tile, native PyTorch [V, H] layout.
    o_ref : (TR, TV) logits tile (lane-dense: TV is a multiple of 128).
    """
    o_ref[...] = lax.dot_general(
        xn_ref[...], w_ref[...],
        dimension_numbers=(((1,), (1,)), ((), ())),   # contract H of both operands
        preferred_element_type=jnp.float32,           # f32 accumulation on the MXU
    ).astype(o_ref.dtype)


# ----------------------------- tile selection ------------------------------ #

def _auto_tiles(R, V, H, mxu_itemsize, out_itemsize):
    """Pick (tile_r, tile_v, tile_r_norm, vmem_limit_bytes) per chip / problem."""
    try:
        vmem_cap = int(getattr(pltpu.get_tpu_info(), "vmem_capacity_bytes",
                               128 * 1024 * 1024))
    except Exception:
        vmem_cap = 64 * 1024 * 1024            # conservative: safe on every generation

    if vmem_cap <= 64 * 1024 * 1024:
        # v7x-class: 64 MiB physical VMEM per TensorCore -> leave compiler headroom.
        tile_r, tile_v = 512, 512
        vmem_limit = 56 * 1024 * 1024
    else:
        # v5e / v6e: 128 MiB VMEM.  tile_r >= v6e's ~650-row bf16 roofline crossover
        # so the weight stream becomes compute-bound for prefill-sized R.
        tile_r, tile_v = 1024, 1024
        vmem_limit = 100 * 1024 * 1024

    # Clamp to the problem size, keeping (8, 128) block alignment.
    tile_r = min(tile_r, _round_up(R, 8))
    tile_v = min(tile_v, _round_up(V, 128))

    # Shrink until the double-buffered working set fits with margin.
    def working_set(tr, tv):
        return (2 * tr * H * mxu_itemsize        # xn tiles
                + 2 * tv * H * mxu_itemsize      # weight tiles
                + 2 * tr * tv * out_itemsize)    # output tiles

    while working_set(tile_r, tile_v) > vmem_limit - (8 << 20) and (
            tile_r > 8 or tile_v > 128):
        if tile_r >= tile_v and tile_r > 8:
            tile_r = max(8, tile_r // 2)
        elif tile_v > 128:
            tile_v = max(128, tile_v // 2)
        else:
            break

    # Norm prologue is memory-bound; a modest tile is already near HBM roofline.
    tile_r_norm = min(256, _round_up(R, 8))
    while (2 * tile_r_norm * H * 4 + 2 * tile_r_norm * H * mxu_itemsize
           > vmem_limit - (8 << 20)) and tile_r_norm > 8:
        tile_r_norm = max(8, tile_r_norm // 2)

    return tile_r, tile_v, tile_r_norm, vmem_limit


# ------------------------------- entry point ------------------------------- #

@functools.partial(
    jax.jit,
    static_argnames=("tile_r", "tile_v", "tile_r_norm", "vmem_limit", "out_dtype"))
def _lm_head_impl(hidden_states, norm_weight, lm_head_weight, *,
                  tile_r, tile_v, tile_r_norm, vmem_limit, out_dtype):
    B, S, H = hidden_states.shape
    V, _ = lm_head_weight.shape
    R = B * S
    mxu_dtype = lm_head_weight.dtype
    mxu_bytes = jnp.dtype(mxu_dtype).itemsize
    out_bytes = jnp.dtype(out_dtype).itemsize

    x2d = hidden_states.reshape(R, H)
    nw2d = norm_weight.reshape(1, H)

    # -- pass 1: RMSNorm prologue, writes xn once in the MXU input dtype -------
    xn = pl.pallas_call(
        _rmsnorm_kernel,
        out_shape=jax.ShapeDtypeStruct((R, H), mxu_dtype),
        grid=(pl.cdiv(R, tile_r_norm),),
        in_specs=[
            pl.BlockSpec((tile_r_norm, H), lambda i: (i, 0)),
            pl.BlockSpec((1, H), lambda i: (0, 0)),
        ],
        out_specs=pl.BlockSpec((tile_r_norm, H), lambda i: (i, 0)),
        compiler_params=pltpu.CompilerParams(
            dimension_semantics=("parallel",),
            vmem_limit_bytes=vmem_limit,
        ),
    )(x2d, nw2d)

    # -- pass 2: logits = xn @ W^T, both grid axes parallel ---------------------
    cost = pl.CostEstimate(
        flops=2 * R * V * H,
        transcendentals=0,
        bytes_accessed=(pl.cdiv(R, tile_r) * V * H * mxu_bytes
                        + pl.cdiv(V, tile_v) * R * H * mxu_bytes
                        + R * V * out_bytes),
    )
    logits = pl.pallas_call(
        _proj_kernel,
        out_shape=jax.ShapeDtypeStruct((R, V), out_dtype),
        grid=(pl.cdiv(R, tile_r), pl.cdiv(V, tile_v)),
        in_specs=[
            pl.BlockSpec((tile_r, H), lambda i, j: (i, 0)),   # rows: constant across j
            pl.BlockSpec((tile_v, H), lambda i, j: (j, 0)),   # weight: native [V, H]
        ],
        out_specs=pl.BlockSpec((tile_r, tile_v), lambda i, j: (i, j)),
        compiler_params=pltpu.CompilerParams(
            # No cross-step scratch carry -> vocab axis is truly independent and
            # can be sharded across v7x's two TensorCores.
            dimension_semantics=("parallel", "parallel"),
            vmem_limit_bytes=vmem_limit,
        ),
        cost_estimate=cost,
    )(xn, lm_head_weight)

    return logits.reshape(B, S, V)


def lm_head(hidden_states, norm_weight, lm_head_weight, *,
            tile_r=None, tile_v=None, out_dtype=None):
    """LmHead forward: logits = RMSNorm(hidden_states) @ lm_head_weight^T.

    hidden_states : [B, S, H]
    norm_weight   : [H]        (transformer.norm.weight)
    lm_head_weight: [V, H]     (llm.lm_head.weight, native PyTorch layout, no bias)

    The MXU runs in the weight dtype (cast f32 weights to bf16 ONCE outside this
    call for the fast production path); accumulation is always f32.  out_dtype
    defaults to the weight dtype (bf16 weights -> bf16 logits, halving writeback).
    """
    B, S, H = hidden_states.shape
    V, Hw = lm_head_weight.shape
    assert Hw == H, "lm_head weight hidden dim mismatch"
    if out_dtype is None:
        out_dtype = lm_head_weight.dtype
    out_dtype = jnp.dtype(out_dtype)

    a_tr, a_tv, tile_r_norm, vmem_limit = _auto_tiles(
        B * S, V, H, jnp.dtype(lm_head_weight.dtype).itemsize, out_dtype.itemsize)
    tile_r = a_tr if tile_r is None else min(tile_r, _round_up(B * S, 8))
    tile_v = a_tv if tile_v is None else min(tile_v, _round_up(V, 128))
    assert tile_r % 8 == 0 and tile_v % 128 == 0

    return _lm_head_impl(hidden_states, norm_weight, lm_head_weight,
                         tile_r=tile_r, tile_v=tile_v, tile_r_norm=tile_r_norm,
                         vmem_limit=vmem_limit, out_dtype=out_dtype)


def _reference(hidden_states, norm_weight, lm_head_weight):
    x = hidden_states.astype(jnp.float32)
    var = jnp.mean(x * x, axis=-1, keepdims=True)
    xn = x * lax.rsqrt(var + RMS_EPS) * norm_weight.astype(jnp.float32)
    return jnp.einsum("bsh,vh->bsv", xn, lm_head_weight.astype(jnp.float32))


if __name__ == "__main__":
    key = jax.random.PRNGKey(0)
    k_x, k_nw, k_w = jax.random.split(key, 3)

    # Small shapes consistent with the forward pass (B, S, H) -> (B, S, V).
    B, S, H, V = 1, 8, 32, 256
    hidden_states = jax.random.normal(k_x, (B, S, H), dtype=jnp.float32)
    norm_weight = 1.0 + 0.1 * jax.random.normal(k_nw, (H,), dtype=jnp.float32)
    lm_head_weight = 0.05 * jax.random.normal(k_w, (V, H), dtype=jnp.float32)

    logits = jax.block_until_ready(lm_head(hidden_states, norm_weight, lm_head_weight))
    ref = _reference(hidden_states, norm_weight, lm_head_weight)
    assert logits.shape == (B, S, V)
    assert jnp.allclose(logits, ref, atol=1e-4, rtol=1e-4), "mismatch vs reference"

    # Ragged shapes: exercise un-padded ragged row / vocab last tiles (no jnp.pad).
    B2, S2, H2, V2 = 2, 5, 128, 384
    k_x2, k_nw2, k_w2 = jax.random.split(jax.random.PRNGKey(1), 3)
    hs2 = jax.random.normal(k_x2, (B2, S2, H2), dtype=jnp.float32)
    nw2 = 1.0 + 0.1 * jax.random.normal(k_nw2, (H2,), dtype=jnp.float32)
    w2 = 0.05 * jax.random.normal(k_w2, (V2, H2), dtype=jnp.float32)
    logits2 = jax.block_until_ready(lm_head(hs2, nw2, w2, tile_v=128))
    ref2 = _reference(hs2, nw2, w2)
    assert logits2.shape == (B2, S2, V2)
    assert jnp.allclose(logits2, ref2, atol=1e-4, rtol=1e-4), "mismatch (ragged)"

    # Production bf16 path: bf16 weights -> bf16 MXU inputs and bf16 logits.
    logits3 = jax.block_until_ready(
        lm_head(hs2.astype(jnp.bfloat16), nw2.astype(jnp.bfloat16),
                w2.astype(jnp.bfloat16)))
    assert logits3.shape == (B2, S2, V2) and logits3.dtype == jnp.bfloat16

    print("KERNEL_OK")
</pallas_src>

<mosaic_0001>
module attributes {stable_mosaic.version = 11 : i64} {
  func.func @_proj_kernel(%arg0: i32, %arg1: i32, %arg2: memref<8x32xf32, #tpu.memory_space<vmem>>, %arg3: memref<256x32xf32, #tpu.memory_space<vmem>>, %arg4: memref<8x256xf32, #tpu.memory_space<vmem>>) attributes {dimension_semantics = [#tpu.dimension_semantics<parallel>, #tpu.dimension_semantics<parallel>], iteration_bounds = array<i64: 1, 1>, scalar_prefetch = 0 : i64, scratch_operands = 0 : i64, tpu.core_type = #tpu.core_type<tc>, window_params = [{transform_indices = @transform_0, window_bounds = array<i64: 8, 32>}, {transform_indices = @transform_1, window_bounds = array<i64: 256, 32>}, {transform_indices = @transform_2, window_bounds = array<i64: 8, 256>}]} {
    %c0 = arith.constant 0 : index
    %c0_0 = arith.constant 0 : index
    %0 = vector.load %arg2[%c0, %c0_0] : memref<8x32xf32, #tpu.memory_space<vmem>>, vector<8x32xf32>
    %c0_1 = arith.constant 0 : index
    %c0_2 = arith.constant 0 : index
    %1 = vector.load %arg3[%c0_1, %c0_2] : memref<256x32xf32, #tpu.memory_space<vmem>>, vector<256x32xf32>
    %cst = arith.constant dense<0.000000e+00> : vector<8x256xf32>
    %2 = tpu.matmul %0, %1, %cst {dimension_numbers = #tpu.dot_dimension_numbers<[1], [1], [0], [0], [0, 0, 1, 0], [], []>} : vector<8x32xf32>, vector<256x32xf32>, vector<8x256xf32> -> vector<8x256xf32>
    %c0_3 = arith.constant 0 : index
    %c0_4 = arith.constant 0 : index
    %3 = vector.load %arg4[%c0_3, %c0_4] : memref<8x256xf32, #tpu.memory_space<vmem>>, vector<8x256xf32>
    tpu.vector_store %arg4[%c0_3, %c0_4], %2 {strides = array<i32>} : memref<8x256xf32, #tpu.memory_space<vmem>>, vector<8x256xf32>,
    return
  }
  func.func @transform_0(%arg0: i32, %arg1: i32) -> (i32, i32) {
    %c0_i32 = arith.constant 0 : i32
    %c0_i32_0 = arith.constant 0 : i32
    return %arg0, %c0_i32 : i32, i32
  }
  func.func @transform_1(%arg0: i32, %arg1: i32) -> (i32, i32) {
    %c0_i32 = arith.constant 0 : i32
    %c0_i32_0 = arith.constant 0 : i32
    return %arg1, %c0_i32 : i32, i32
  }
  func.func @transform_2(%arg0: i32, %arg1: i32) -> (i32, i32) {
    %c0_i32 = arith.constant 0 : i32
    return %arg0, %arg1 : i32, i32
  }
}

module attributes {stable_mosaic.version = 11 : i64} {
  func.func @_rmsnorm_kernel(%arg0: i32, %arg1: memref<8x32xf32, #tpu.memory_space<vmem>>, %arg2: memref<1x32xf32, #tpu.memory_space<vmem>>, %arg3: memref<8x32xf32, #tpu.memory_space<vmem>>) attributes {dimension_semantics = [#tpu.dimension_semantics<parallel>], iteration_bounds = array<i64: 1>, scalar_prefetch = 0 : i64, scratch_operands = 0 : i64, tpu.core_type = #tpu.core_type<tc>, window_params = [{transform_indices = @transform_0, window_bounds = array<i64: 8, 32>}, {pipeline_mode = #tpu.pipeline_mode<synchronous>, transform_indices = @transform_1, window_bounds = array<i64: 1, 32>}, {transform_indices = @transform_2, window_bounds = array<i64: 8, 32>}]} {
    %c0 = arith.constant 0 : index
    %c0_0 = arith.constant 0 : index
    %0 = vector.load %arg1[%c0, %c0_0] : memref<8x32xf32, #tpu.memory_space<vmem>>, vector<8x32xf32>
    %1 = arith.mulf %0, %0 : vector<8x32xf32>
    %cst = arith.constant dense<0.000000e+00> : vector<8xf32>
    %2 = vector.multi_reduction <add>, %1, %cst [1] : vector<8x32xf32> to vector<8xf32>
    %3 = vector.shape_cast %2 : vector<8xf32> to vector<8x1xf32>
    %cst_1 = arith.constant 3.200000e+01 : f32
    %4 = vector.broadcast %cst_1 : f32 to vector<8x1xf32>
    %5 = arith.divf %3, %4 : vector<8x1xf32>
    %cst_2 = arith.constant 9.99999997E-7 : f32
    %6 = vector.broadcast %cst_2 : f32 to vector<8x1xf32>
    %7 = arith.addf %5, %6 : vector<8x1xf32>
    %8 = math.rsqrt %7 : vector<8x1xf32>
    %9 = vector.broadcast %8 : vector<8x1xf32> to vector<8x32xf32>
    %10 = arith.mulf %0, %9 : vector<8x32xf32>
    %c0_3 = arith.constant 0 : index
    %c0_4 = arith.constant 0 : index
    %11 = vector.load %arg2[%c0_3, %c0_4] : memref<1x32xf32, #tpu.memory_space<vmem>>, vector<1x32xf32>
    %12 = vector.broadcast %11 : vector<1x32xf32> to vector<8x32xf32>
    %13 = arith.mulf %10, %12 : vector<8x32xf32>
    %c0_5 = arith.constant 0 : index
    %c0_6 = arith.constant 0 : index
    %14 = vector.load %arg3[%c0_5, %c0_6] : memref<8x32xf32, #tpu.memory_space<vmem>>, vector<8x32xf32>
    tpu.vector_store %arg3[%c0_5, %c0_6], %13 {strides = array<i32>} : memref<8x32xf32, #tpu.memory_space<vmem>>, vector<8x32xf32>,
    return
  }
  func.func @transform_0(%arg0: i32) -> (i32, i32) {
    %c0_i32 = arith.constant 0 : i32
    %c0_i32_0 = arith.constant 0 : i32
    return %arg0, %c0_i32 : i32, i32
  }
  func.func @transform_1(%arg0: i32) -> (i32, i32) {
    %c0_i32 = arith.constant 0 : i32
    %c0_i32_0 = arith.constant 0 : i32
    %c0_i32_1 = arith.constant 0 : i32
    return %c0_i32, %c0_i32_0 : i32, i32
  }
  func.func @transform_2(%arg0: i32) -> (i32, i32) {
    %c0_i32 = arith.constant 0 : i32
    %c0_i32_0 = arith.constant 0 : i32
    return %arg0, %c0_i32 : i32, i32
  }
}

</mosaic_0001>

<llo_original>
// kernel: _lm_head_impl.2
$region0: #{_lm_head_impl.2}
  #allocation0 [shape = 'u32[]', space=smem, size = 0x4, offset = 0x4, fixed_abs, tag = 'smem constant byte address 0x4 - core index']
  #allocation1 [shape = 'u32[72,128]{1,0:T(1,128)}', space=vmem, size = 0x9000, scoped, tag = 'internal scratch']
  %s0 = inlined_call_operand.hbm [shape: f32[8,32], index: 0, kind: input, shape index: {}]
  %s1 = inlined_call_operand.vmem [shape: f32[1,32], index: 1, kind: input, shape index: {}]
  %s2 = inlined_call_operand.vmem [shape: f32[8,32], index: 2, kind: output, shape index: {}]
  %s3 = sld [smem:[#allocation0]]
  $region22: #{_lm_head_impl.2} parent=0
    _
  %s5 = ssub.s32 1, %s3
  %s6 = scalar_select 0, %s5, %s3
  $region1: #{_lm_head_impl.2} parent=0
    #allocation2 [shape = 'u8[4096]{0}', space=vmem, size = 0x1000, scoped, tag = 'input window, operand 0, single buffered']
    #allocation3 [shape = 's32[1]{0}', space=sflag, size = 0x4, scoped, tag = 'scoped memory for _lm_head_impl.2']
    %7 = vsyncpa [#allocation3], 0
    // Predicated region
    $region2: #{_lm_head_impl.2} parent=1 // pred_check
      _
    $region3: #{_lm_head_impl.2} parent=1 // pred_check_branch
      %9 = sbr.rel (0) target = $region5
    $region4: #{_lm_head_impl.2} parent=1 // pred_region
      %11 = vsyncadd [#allocation3], 0
      %s13 = sshll.u32 %s0, 4
      %s14 = int_to_ptr.hbm [resolvable:$true] %s13
      %s15 = sshll.u32 [#allocation2], 4
      %s16 = int_to_ptr.vmem [resolvable:$true] %s15
      %18 = dma.hbm_to_vmem [thread:$0]  %s14, 128, %s16, [#allocation3]
    $region5: #{_lm_head_impl.2} parent=1 // pred_fallthru
      _
    // Predicated region
    $region6: #{_lm_head_impl.2} parent=1 // pred_check
      _
    $region7: #{_lm_head_impl.2} parent=1 // pred_check_branch
      %20 = sbr.rel (0) target = $region9
    $region8: #{_lm_head_impl.2} parent=1 // pred_region
      _
    $region9: #{_lm_head_impl.2} parent=1 // pred_fallthru
      _
    // Predicated region
    $region10: #{_lm_head_impl.2} parent=1 // pred_check
      _
    $region11: #{_lm_head_impl.2} parent=1 // pred_check_branch
      %22 = sbr.rel (0) target = $region13
    $region12: #{_lm_head_impl.2} parent=1 // pred_region
      %24 = dma.done [#allocation3], 128
    $region13: #{_lm_head_impl.2} parent=1 // pred_fallthru
      _
    %v25 = vld [vmem:[#allocation2] sm:$0xff]
    %v26 = vmul.f32 %v25, %v25
    %vm27 = vcmask 261120
    %v28 = vsel %vm27, %v26, 0.0
    %29 = vadd.xlane.f32.xlu0 %v28
    %v30 = vpop.xlane.xlu0 %29
    %v31 = vrcp.pop 32.0
    %v32 = vmul.f32 32.0, %v31
    %v33 = vsub.f32 1.0, %v32
    %v34 = vmul.f32 %v31, %v33
    %v35 = vadd.f32 %v31, %v34
    %vm36 = vweird.f32 %v31
    %v37 = vsel %vm36, %v31, %v35
    %v38 = vmul.f32 %v30, %v37
    %v39 = vadd.f32 %v38, 1e-06
    %v40 = vrsqrt.pop %v39
    %v41 = vmul.f32 %v40, %v39
    %v42 = vmul.f32 %v41, %v40
    %v43 = vmul.f32 0.5, %v42
    %v44 = vsub.f32 1.5, %v43
    %v45 = vmul.f32 %v40, %v44
    %vm46 = vweird.f32 %v39
    %vm47 = vweird.f32 %v40
    %vm48 = vmor %vm46, %vm47
    %v49 = vsel %vm48, %v40, %v45
    %v50 = vmul.f32 %v25, %v49
    %v51 = vld [vmem:[%s1] sm:$0x1]
    %v53 = vperm.slane %v51, 0
    %v55 = vmul.f32 %v50, %v53
    %56 = vst.msk [vmem:[%s2] sm:$0xff] %vm27, %v55
    // Predicated region
    $region14: #{_lm_head_impl.2} parent=1 // pred_check
      _
    $region15: #{_lm_head_impl.2} parent=1 // pred_check_branch
      %58 = sbr.rel (0) target = $region17
    $region16: #{_lm_head_impl.2} parent=1 // pred_region
      _
    $region17: #{_lm_head_impl.2} parent=1 // pred_fallthru
      _
    // Predicated region
    $region18: #{_lm_head_impl.2} parent=1 // pred_check
      _
    $region19: #{_lm_head_impl.2} parent=1 // pred_check_branch
      %60 = sbr.rel (0) target = $region21
    $region20: #{_lm_head_impl.2} parent=1 // pred_region
      _
    $region21: #{_lm_head_impl.2} parent=1 // pred_fallthru
      _
    %61 = vsyncpa [#allocation3], 1

// kernel: _lm_head_impl.3
$region0: #{_lm_head_impl.3}
  #allocation0 [shape = 'u32[]', space=smem, size = 0x4, offset = 0x4, fixed_abs, tag = 'smem constant byte address 0x4 - core index']
  #allocation1 [shape = 'u32[72,128]{1,0:T(1,128)}', space=vmem, size = 0x9000, scoped, tag = 'internal scratch']
  %s0 = inlined_call_operand.vmem [shape: f32[8,32], index: 0, kind: input, shape index: {}]
  %s1 = inlined_call_operand.vmem [shape: f32[256,32], index: 1, kind: input, shape index: {}]
  %s2 = inlined_call_operand.hbm [shape: f32[8,256], index: 2, kind: output, shape index: {}]
  %s3 = sld [smem:[#allocation0]]
  $region18: #{_lm_head_impl.3} parent=0
    _
  %s5 = ssub.s32 1, %s3
  %s6 = scalar_select 0, %s5, %s3
  $region1: #{_lm_head_impl.3} parent=0
    #allocation2 [shape = 'u8[8192]{0}', space=vmem, size = 0x2000, scoped, tag = 'output window, operand 0, single buffered']
    #allocation3 [shape = 's32[1]{0}', space=sflag, size = 0x4, scoped, tag = 'scoped memory for _lm_head_impl.3']
    %7 = vsyncpa [#allocation3], 0
    // Predicated region
    $region2: #{_lm_head_impl.3} parent=1 // pred_check
      _
    $region3: #{_lm_head_impl.3} parent=1 // pred_check_branch
      %9 = sbr.rel (0) target = $region5
    $region4: #{_lm_head_impl.3} parent=1 // pred_region
      _
    $region5: #{_lm_head_impl.3} parent=1 // pred_fallthru
      _
    // Predicated region
    $region6: #{_lm_head_impl.3} parent=1 // pred_check
      _
    $region7: #{_lm_head_impl.3} parent=1 // pred_check_branch
      %11 = sbr.rel (0) target = $region9
    $region8: #{_lm_head_impl.3} parent=1 // pred_region
      _
    $region9: #{_lm_head_impl.3} parent=1 // pred_fallthru
      _
    %v12 = vld [vmem:[%s0] sm:$0xff]
    %v13 = vld [vmem:[%s1] sm:$0xff]
    %v14 = vld [vmem:[%s1 + $0x8] sm:$0xff]
    %v15 = vld [vmem:[%s1 + $0x10] sm:$0xff]
    %v16 = vld [vmem:[%s1 + $0x18] sm:$0xff]
    %v17 = vld [vmem:[%s1 + $0x20] sm:$0xff]
    %v18 = vld [vmem:[%s1 + $0x28] sm:$0xff]
    %v19 = vld [vmem:[%s1 + $0x30] sm:$0xff]
    %v20 = vld [vmem:[%s1 + $0x38] sm:$0xff]
    %v21 = vld [vmem:[%s1 + $0x40] sm:$0xff]
    %v22 = vld [vmem:[%s1 + $0x48] sm:$0xff]
    %v23 = vld [vmem:[%s1 + $0x50] sm:$0xff]
    %v24 = vld [vmem:[%s1 + $0x58] sm:$0xff]
    %v25 = vld [vmem:[%s1 + $0x60] sm:$0xff]
    %v26 = vld [vmem:[%s1 + $0x68] sm:$0xff]
    %v27 = vld [vmem:[%s1 + $0x70] sm:$0xff]
    %v28 = vld [vmem:[%s1 + $0x78] sm:$0xff]
    %v29 = vld [vmem:[%s1 + $0x80] sm:$0xff]
    %v30 = vld [vmem:[%s1 + $0x88] sm:$0xff]
    %v31 = vld [vmem:[%s1 + $0x90] sm:$0xff]
    %v32 = vld [vmem:[%s1 + $0x98] sm:$0xff]
    %v33 = vld [vmem:[%s1 + $0xa0] sm:$0xff]
    %v34 = vld [vmem:[%s1 + $0xa8] sm:$0xff]
    %v35 = vld [vmem:[%s1 + $0xb0] sm:$0xff]
    %v36 = vld [vmem:[%s1 + $0xb8] sm:$0xff]
    %v37 = vld [vmem:[%s1 + $0xc0] sm:$0xff]
    %v38 = vld [vmem:[%s1 + $0xc8] sm:$0xff]
    %v39 = vld [vmem:[%s1 + $0xd0] sm:$0xff]
    %v40 = vld [vmem:[%s1 + $0xd8] sm:$0xff]
    %v41 = vld [vmem:[%s1 + $0xe0] sm:$0xff]
    %v42 = vld [vmem:[%s1 + $0xe8] sm:$0xff]
    %v43 = vld [vmem:[%s1 + $0xf0] sm:$0xff]
    %v44 = vld [vmem:[%s1 + $0xf8] sm:$0xff]
    %vm45 = vcmask 261120
    %v47 = vsel %vm45, %v12, 0
    %v50 = vsel %vm45, %v13, 0
    %v53 = vsel %vm45, %v14, 0
    %v56 = vsel %vm45, %v15, 0
    %v59 = vsel %vm45, %v16, 0
    %v62 = vsel %vm45, %v17, 0
    %v65 = vsel %vm45, %v18, 0
    %v68 = vsel %vm45, %v19, 0
    %v71 = vsel %vm45, %v20, 0
    %v74 = vsel %vm45, %v21, 0
    %v77 = vsel %vm45, %v22, 0
    %v80 = vsel %vm45, %v23, 0
    %v83 = vsel %vm45, %v24, 0
    %v86 = vsel %vm45, %v25, 0
    %v89 = vsel %vm45, %v26, 0
    %v92 = vsel %vm45, %v27, 0
    %v95 = vsel %vm45, %v28, 0
    %v98 = vsel %vm45, %v29, 0
    %v101 = vsel %vm45, %v30, 0
    %v104 = vsel %vm45, %v31, 0
    %v107 = vsel %vm45, %v32, 0
    %v110 = vsel %vm45, %v33, 0
    %v113 = vsel %vm45, %v34, 0
    %v116 = vsel %vm45, %v35, 0
    %v119 = vsel %vm45, %v36, 0
    %v122 = vsel %vm45, %v37, 0
    %v125 = vsel %vm45, %v38, 0
    %v128 = vsel %vm45, %v39, 0
    %v131 = vsel %vm45, %v40, 0
    %v134 = vsel %vm45, %v41, 0
    %v137 = vsel %vm45, %v42, 0
    %v140 = vsel %vm45, %v43, 0
    %v143 = vsel %vm45, %v44, 0
    %145 = vmatpush.xpose.msra.mxu0 %v95
    %146 = vmatpush.xpose.msra.mxu0 %v92
    %147 = vmatpush.xpose.msra.mxu0 %v89
    %148 = vmatpush.xpose.msra.mxu0 %v86
    %149 = vmatpush.xpose.msra.mxu0 %v83
    %150 = vmatpush.xpose.msra.mxu0 %v80
    %151 = vmatpush.xpose.msra.mxu0 %v77
    %152 = vmatpush.xpose.msra.mxu0 %v74
    %153 = vmatpush.xpose.msra.mxu0 %v71
    %154 = vmatpush.xpose.msra.mxu0 %v68
    %155 = vmatpush.xpose.msra.mxu0 %v65
    %156 = vmatpush.xpose.msra.mxu0 %v62
    %157 = vmatpush.xpose.msra.mxu0 %v59
    %158 = vmatpush.xpose.msra.mxu0 %v56
    %159 = vmatpush.xpose.msra.mxu0 %v53
    %160 = vmatpush.xpose.msra.mxu0 %v50
    %161 = vmatmul.f32.gmra.mxu0 %v47
    %v162 = vpop.f32.mrf.mxu0
    %v163 = vadd.f32 0.0, %v162
    %164 = vdwg.mxu0
    %165 = vmatpush.xpose.msra.mxu0 %v143
    %166 = vmatpush.xpose.msra.mxu0 %v140
    %167 = vmatpush.xpose.msra.mxu0 %v137
    %168 = vmatpush.xpose.msra.mxu0 %v134
    %169 = vmatpush.xpose.msra.mxu0 %v131
    %170 = vmatpush.xpose.msra.mxu0 %v128
    %171 = vmatpush.xpose.msra.mxu0 %v125
    %172 = vmatpush.xpose.msra.mxu0 %v122
    %173 = vmatpush.xpose.msra.mxu0 %v119
    %174 = vmatpush.xpose.msra.mxu0 %v116
    %175 = vmatpush.xpose.msra.mxu0 %v113
    %176 = vmatpush.xpose.msra.mxu0 %v110
    %177 = vmatpush.xpose.msra.mxu0 %v107
    %178 = vmatpush.xpose.msra.mxu0 %v104
    %179 = vmatpush.xpose.msra.mxu0 %v101
    %180 = vmatpush.xpose.msra.mxu0 %v98
    %181 = vmatmul.f32.gmra.mxu0 %v47
    %v182 = vpop.f32.mrf.mxu0
    %v183 = vadd.f32 0.0, %v182
    %184 = vdwg.mxu0
    %185 = vst [vmem:[#allocation2] sm:$0xff] %v163
    %186 = vst [vmem:[#allocation2 + $0x8] sm:$0xff] %v183
    // Predicated region
    $region10: #{_lm_head_impl.3} parent=1 // pred_check
      _
    $region11: #{_lm_head_impl.3} parent=1 // pred_check_branch
      %188 = sbr.rel (0) target = $region13
    $region12: #{_lm_head_impl.3} parent=1 // pred_region
      %190 = vsyncadd [#allocation3], 0
      %s192 = sshll.u32 [#allocation2], 4
      %s193 = int_to_ptr.vmem [resolvable:$true] %s192
      %s194 = sshll.u32 %s2, 4
      %s195 = int_to_ptr.hbm [resolvable:$true] %s194
      %197 = dma.vmem_to_hbm [thread:$0]  %s193, 256, %s195, [#allocation3]
    $region13: #{_lm_head_impl.3} parent=1 // pred_fallthru
      _
    // Predicated region
    $region14: #{_lm_head_impl.3} parent=1 // pred_check
      _
    $region15: #{_lm_head_impl.3} parent=1 // pred_check_branch
      %199 = sbr.rel (0) target = $region17
    $region16: #{_lm_head_impl.3} parent=1 // pred_region
      %201 = dma.done [#allocation3], 256
    $region17: #{_lm_head_impl.3} parent=1 // pred_fallthru
      _
    %202 = vsyncpa [#allocation3], 1

</llo_original>
